<compile_context>
chip_gen: v7x
topology: tpu7x:2x2x1
jax: 0.10.0
libtpu: 0.0.40
codegen_flags: <defaults>
</compile_context>

<pallas_src>
import functools
import numpy as np

import jax
import jax.numpy as jnp
from jax.experimental import pallas as pl
from jax.experimental.pallas import tpu as pltpu

F32 = jnp.float32
BF16 = jnp.bfloat16
_VMEM = pl.BlockSpec(memory_space=pltpu.MemorySpace.VMEM)  # whole-array VMEM block
_VMEM_LIMIT = 48 * 1024 * 1024  # safe on v5e/v6e (128 MiB phys) and v7x (64 MiB)


def _pick_tile(dim, pref):
    """Largest tile <= pref that is a multiple of 128 and divides dim, else dim."""
    if dim <= pref:
        return dim
    t = (pref // 128) * 128
    while t >= 128:
        if dim % t == 0:
            return t
        t -= 128
    return dim


def _apply_act(y, act):
    if act == "relu":
        return jnp.maximum(y, 0.0)
    if act == "tanh":
        return jnp.tanh(y)
    if act == "gelu":  # exact (erf) GELU, matching HF BERT default "gelu"
        return 0.5 * y * (1.0 + jax.lax.erf(y * np.float32(1.0 / np.sqrt(2.0))))
    return y


# ----------------------------------------------------------------------------
# Tiled matmul (+ bias + activation) and matmul (+ bias + residual + LayerNorm)
# ----------------------------------------------------------------------------
def _linear_kernel(x_ref, w_ref, b_ref, o_ref, acc_ref, *, act):
    k = pl.program_id(2)

    @pl.when(k == 0)
    def _():
        acc_ref[...] = jnp.zeros_like(acc_ref)

    acc_ref[...] += jnp.dot(x_ref[...], w_ref[...],
                            preferred_element_type=jnp.float32)

    @pl.when(k == pl.num_programs(2) - 1)
    def _():
        y = acc_ref[...] + b_ref[...]
        o_ref[...] = _apply_act(y, act).astype(o_ref.dtype)


def _linear_res_ln_kernel(x_ref, w_ref, b_ref, r_ref, g_ref, be_ref,
                          o_ref, acc_ref, *, eps):
    k = pl.program_id(2)

    @pl.when(k == 0)
    def _():
        acc_ref[...] = jnp.zeros_like(acc_ref)

    acc_ref[...] += jnp.dot(x_ref[...], w_ref[...],
                            preferred_element_type=jnp.float32)

    @pl.when(k == pl.num_programs(2) - 1)
    def _():
        y = acc_ref[...] + b_ref[...] + r_ref[...].astype(jnp.float32)
        mu = jnp.mean(y, axis=-1, keepdims=True)
        yc = y - mu
        var = jnp.mean(yc * yc, axis=-1, keepdims=True)
        out = yc * jax.lax.rsqrt(var + eps) * g_ref[...] + be_ref[...]
        o_ref[...] = out.astype(o_ref.dtype)


def linear(x, w, b, act="none", residual=None, ln_gamma=None, ln_beta=None,
           out_dtype=BF16, eps=1e-12, tm_pref=512, tn_pref=768, tk_pref=512,
           split3=False):
    """y = act(x @ w + b), or LayerNorm(x @ w + b + residual) when LN params given.

    x: (M, K); w: (K, N) (PyTorch weight transposed); b: (N,).
    split3=True (fused QKV) writes the result as (3, M, N//3) so the attention
    kernel can consume Q/K/V without any XLA reshape/transpose glue."""
    M, K = x.shape
    K2, N = w.shape
    assert K == K2
    x = x.astype(BF16)
    w = w.astype(BF16)
    b2 = b.reshape(1, N).astype(F32)
    fuse_ln = ln_gamma is not None
    assert not (fuse_ln and split3)

    tm = _pick_tile(M, tm_pref)
    tk = _pick_tile(K, tk_pref)
    if fuse_ln:
        tn = N                                  # LN reduces over the full feature dim
    elif split3:
        assert N % 3 == 0
        tn = _pick_tile(N // 3, tn_pref)        # tile each Q/K/V column group
    else:
        tn = _pick_tile(N, tn_pref)
    assert M % tm == 0 and N % tn == 0 and K % tk == 0

    grid = (M // tm, N // tn, K // tk)
    x_spec = pl.BlockSpec((tm, tk), lambda i, j, k: (i, k))
    w_spec = pl.BlockSpec((tk, tn), lambda i, j, k: (k, j))
    vec_spec = pl.BlockSpec((1, tn), lambda i, j, k: (0, j))

    cost = pl.CostEstimate(flops=2 * M * N * K, transcendentals=0,
                           bytes_accessed=2 * (M * K + K * N + M * N))
    cparams = pltpu.CompilerParams(
        dimension_semantics=("parallel", "parallel", "arbitrary"),
        vmem_limit_bytes=_VMEM_LIMIT)

    if fuse_ln:
        # NOTE: residual / gamma / beta are only read in the k==last epilogue;
        # their block index is k-invariant so Pallas skips re-DMA across k.
        r = residual.astype(BF16)
        g = ln_gamma.reshape(1, N).astype(F32)
        be = ln_beta.reshape(1, N).astype(F32)
        return pl.pallas_call(
            functools.partial(_linear_res_ln_kernel, eps=eps),
            out_shape=jax.ShapeDtypeStruct((M, N), out_dtype),
            grid=grid,
            in_specs=[x_spec, w_spec, vec_spec,
                      pl.BlockSpec((tm, tn), lambda i, j, k: (i, j)),
                      vec_spec, vec_spec],
            out_specs=pl.BlockSpec((tm, tn), lambda i, j, k: (i, j)),
            scratch_shapes=[pltpu.VMEM((tm, tn), F32)],
            compiler_params=cparams,
            cost_estimate=cost,
        )(x, w, b2, r, g, be)

    if split3:
        Ho = N // 3
        assert Ho % tn == 0
        jH = Ho // tn
        o_spec = pl.BlockSpec((None, tm, tn),
                              lambda i, j, k: (j // jH, i, j % jH))
        return pl.pallas_call(
            functools.partial(_linear_kernel, act=act),
            out_shape=jax.ShapeDtypeStruct((3, M, Ho), out_dtype),
            grid=grid,
            in_specs=[x_spec, w_spec, vec_spec],
            out_specs=o_spec,
            scratch_shapes=[pltpu.VMEM((tm, tn), F32)],
            compiler_params=cparams,
            cost_estimate=cost,
        )(x, w, b2)

    return pl.pallas_call(
        functools.partial(_linear_kernel, act=act),
        out_shape=jax.ShapeDtypeStruct((M, N), out_dtype),
        grid=grid,
        in_specs=[x_spec, w_spec, vec_spec],
        out_specs=pl.BlockSpec((tm, tn), lambda i, j, k: (i, j)),
        scratch_shapes=[pltpu.VMEM((tm, tn), F32)],
        compiler_params=cparams,
        cost_estimate=cost,
    )(x, w, b2)


# ----------------------------------------------------------------------------
# Standalone LayerNorm (no residual) — used for the embedding LN only
# ----------------------------------------------------------------------------
def _layernorm_kernel(x_ref, g_ref, b_ref, o_ref, *, eps):
    x = x_ref[...].astype(jnp.float32)
    mu = jnp.mean(x, axis=-1, keepdims=True)
    xc = x - mu
    var = jnp.mean(xc * xc, axis=-1, keepdims=True)
    o_ref[...] = (xc * jax.lax.rsqrt(var + eps) * g_ref[...]
                  + b_ref[...]).astype(o_ref.dtype)


def layernorm(x, gamma, beta, out_dtype=BF16, eps=1e-12, tm_pref=512):
    M, H = x.shape
    tm = _pick_tile(M, tm_pref)
    return pl.pallas_call(
        functools.partial(_layernorm_kernel, eps=eps),
        out_shape=jax.ShapeDtypeStruct((M, H), out_dtype),
        grid=(M // tm,),
        in_specs=[pl.BlockSpec((tm, H), lambda i: (i, 0)),
                  pl.BlockSpec((1, H), lambda i: (0, 0)),
                  pl.BlockSpec((1, H), lambda i: (0, 0))],
        out_specs=pl.BlockSpec((tm, H), lambda i: (i, 0)),
        compiler_params=pltpu.CompilerParams(dimension_semantics=("parallel",)),
    )(x, gamma.reshape(1, H).astype(F32), beta.reshape(1, H).astype(F32))


# ----------------------------------------------------------------------------
# Flash-style attention, lane-dense I/O.
#   input : qkv3 (3, B*S, H) bf16 straight from the fused QKV projection
#           (Q columns already carry the 1/sqrt(dH) factor)
#   output: ctx (B*S, H) bf16, directly consumable by the output projection
#   grid  : (batch, q-tile, kv-tile); online softmax with per-head m/l/acc
#           scratch; exp optionally in bf16 (v6e/v7x EUP).
# ----------------------------------------------------------------------------
def _flash_attn_kernel(q_ref, k_ref, v_ref, m_ref, o_ref,
                       m_sc, l_sc, acc_sc, *, nH, dH, exp_bf16):
    ki = pl.program_id(2)

    @pl.when(ki == 0)
    def _():
        m_sc[...] = jnp.full_like(m_sc, -jnp.inf)
        l_sc[...] = jnp.zeros_like(l_sc)
        acc_sc[...] = jnp.zeros_like(acc_sc)

    q = q_ref[...]                      # (tq,  H) bf16
    k = k_ref[...]                      # (tkv, H) bf16
    v = v_ref[...]                      # (tkv, H) bf16
    bias = m_ref[...]                   # (1, tkv) additive mask, f32

    nt = (((1,), (1,)), ((), ()))       # contract last dims of both: A @ B^T
    for h in range(nH):                 # static unroll over heads
        sl = slice(h * dH, (h + 1) * dH)
        s = jax.lax.dot_general(q[:, sl], k[:, sl], nt,
                                preferred_element_type=F32)      # (tq, tkv)
        s = s + bias
        m_prev = m_sc[h]                                         # (tq, 1)
        m_new = jnp.maximum(m_prev, jnp.max(s, axis=-1, keepdims=True))
        if exp_bf16:                    # v6e/v7x: bf16 exp on the EUP
            alpha = jnp.exp((m_prev - m_new).astype(BF16)).astype(F32)
            p = jnp.exp((s - m_new).astype(BF16))
            p_sum = jnp.sum(p.astype(F32), axis=-1, keepdims=True)
        else:                           # f32 exp (required on v5e)
            alpha = jnp.exp(m_prev - m_new)
            p = jnp.exp(s - m_new)
            p_sum = jnp.sum(p, axis=-1, keepdims=True)
        l_sc[h] = alpha * l_sc[h] + p_sum
        acc_sc[h] = alpha * acc_sc[h] + jnp.dot(p.astype(BF16), v[:, sl],
                                                preferred_element_type=F32)
        m_sc[h] = m_new

    @pl.when(ki == pl.num_programs(2) - 1)
    def _():
        outs = [acc_sc[h] * pl.reciprocal(l_sc[h], approx=True)
                for h in range(nH)]
        # (tq, H) lane-dense store — no masked partial stores, no transposes.
        o_ref[...] = jnp.concatenate(outs, axis=-1).astype(o_ref.dtype)


def flash_attention(qkv3, mask_bias, *, nH, dH, S,
                    tq_pref=256, tkv_pref=256, exp_bf16=False):
    """qkv3: (3, B*S, H) bf16; mask_bias: (B, 1, S) additive (0 or -1e9) f32."""
    H = nH * dH
    three, M, H2 = qkv3.shape
    assert three == 3 and H2 == H and M % S == 0
    B = M // S
    tq = _pick_tile(S, tq_pref)
    tkv = _pick_tile(S, tkv_pref)
    sq, skv = S // tq, S // tkv

    cost = pl.CostEstimate(flops=4 * B * nH * S * S * dH,
                           transcendentals=B * nH * S * S,
                           bytes_accessed=2 * (3 * M * H + M * H))
    return pl.pallas_call(
        functools.partial(_flash_attn_kernel, nH=nH, dH=dH, exp_bf16=exp_bf16),
        out_shape=jax.ShapeDtypeStruct((M, H), BF16),
        grid=(B, sq, skv),
        in_specs=[
            pl.BlockSpec((None, tq, H),  lambda b, qi, ki: (0, b * sq + qi, 0)),
            pl.BlockSpec((None, tkv, H), lambda b, qi, ki: (1, b * skv + ki, 0)),
            pl.BlockSpec((None, tkv, H), lambda b, qi, ki: (2, b * skv + ki, 0)),
            pl.BlockSpec((None, 1, tkv), lambda b, qi, ki: (b, 0, ki)),
        ],
        out_specs=pl.BlockSpec((tq, H), lambda b, qi, ki: (b * sq + qi, 0)),
        scratch_shapes=[pltpu.VMEM((nH, tq, 1), F32),    # running max m
                        pltpu.VMEM((nH, tq, 1), F32),    # running sum l
                        pltpu.VMEM((nH, tq, dH), F32)],  # output accumulator
        compiler_params=pltpu.CompilerParams(
            dimension_semantics=("parallel", "parallel", "arbitrary"),
            vmem_limit_bytes=_VMEM_LIMIT),
        cost_estimate=cost,
    )(qkv3, qkv3, qkv3, mask_bias.astype(F32))


# ----------------------------------------------------------------------------
# Fused CLS pooler (tanh) + 4-layer projection MLP (ReLU, dropout=identity)
# ----------------------------------------------------------------------------
def _head_kernel(x_ref, pw, pb, w0, b0, w1, b1, w2, b2, w3, b3, o_ref):
    def mm(a, w_r, b_r):
        return jnp.dot(a, w_r[...], preferred_element_type=jnp.float32) + b_r[...]

    y = jnp.tanh(mm(x_ref[...], pw, pb))                       # BERT pooler
    y = jnp.maximum(mm(y.astype(BF16), w0, b0), 0.0)
    y = jnp.maximum(mm(y.astype(BF16), w1, b1), 0.0)
    y = jnp.maximum(mm(y.astype(BF16), w2, b2), 0.0)
    o_ref[...] = mm(y.astype(BF16), w3, b3).astype(o_ref.dtype)


def pooler_proj_head(cls, p):
    B = cls.shape[0]
    feat_out = p["proj3_w"].shape[1]
    args = [cls.astype(BF16),
            p["pooler_w"].astype(BF16), p["pooler_b"].reshape(1, -1).astype(F32),
            p["proj0_w"].astype(BF16), p["proj0_b"].reshape(1, -1).astype(F32),
            p["proj1_w"].astype(BF16), p["proj1_b"].reshape(1, -1).astype(F32),
            p["proj2_w"].astype(BF16), p["proj2_b"].reshape(1, -1).astype(F32),
            p["proj3_w"].astype(BF16), p["proj3_b"].reshape(1, -1).astype(F32)]
    return pl.pallas_call(
        _head_kernel,
        out_shape=jax.ShapeDtypeStruct((B, feat_out), F32),
        in_specs=[_VMEM] * len(args),
        out_specs=_VMEM,
    )(*args)


# ----------------------------------------------------------------------------
# Deterministic parameter construction (shapes follow the PyTorch module).
# PyTorch nn.Linear stores weight (out, in); we build the transposed (in, out).
# 1/sqrt(dH) is folded into the Q columns of the fused QKV weight/bias.
# ----------------------------------------------------------------------------
def _dense(key, in_dim, out_dim, std=0.02):
    w = jax.random.normal(key, (in_dim, out_dim), F32) * std
    b = jnp.zeros((out_dim,), F32)
    return w, b


def init_params(key, cfg, mlp_sizes, mlp_feat_out):
    H, I, L = cfg["hidden"], cfg["intermediate"], cfg["layers"]
    dH = H // cfg["heads"]
    q_scale = np.float32(1.0 / np.sqrt(dH))
    keys = iter(jax.random.split(key, 64))
    p = {}
    p["word_emb"] = jax.random.normal(next(keys), (cfg["vocab"], H), F32) * 0.02
    p["pos_emb"] = jax.random.normal(next(keys), (cfg["max_pos"], H), F32) * 0.02
    p["type_emb"] = jax.random.normal(next(keys), (cfg["type_vocab"], H), F32) * 0.02
    p["emb_ln_g"], p["emb_ln_b"] = jnp.ones((H,), F32), jnp.zeros((H,), F32)

    layers = []
    for _ in range(L):
        lyr = {}
        q_w, q_b = _dense(next(keys), H, H)
        k_w, k_b = _dense(next(keys), H, H)
        v_w, v_b = _dense(next(keys), H, H)
        # fused QKV projection weight (H, 3H); attention scale folded into Q.
        lyr["qkv_w"] = jnp.concatenate([q_w * q_scale, k_w, v_w], axis=1)
        lyr["qkv_b"] = jnp.concatenate([q_b * q_scale, k_b, v_b], axis=0)
        lyr["o_w"], lyr["o_b"] = _dense(next(keys), H, H)
        lyr["attn_ln_g"], lyr["attn_ln_b"] = jnp.ones((H,), F32), jnp.zeros((H,), F32)
        lyr["i_w"], lyr["i_b"] = _dense(next(keys), H, I)
        lyr["f_w"], lyr["f_b"] = _dense(next(keys), I, H)
        lyr["ffn_ln_g"], lyr["ffn_ln_b"] = jnp.ones((H,), F32), jnp.zeros((H,), F32)
        layers.append(lyr)
    p["layers"] = layers

    p["pooler_w"], p["pooler_b"] = _dense(next(keys), H, H)

    s0, s1, s2 = mlp_sizes
    p["proj0_w"], p["proj0_b"] = _dense(next(keys), H, s0)
    p["proj1_w"], p["proj1_b"] = _dense(next(keys), s0, s1)
    p["proj2_w"], p["proj2_b"] = _dense(next(keys), s1, s2)
    p["proj3_w"], p["proj3_b"] = _dense(next(keys), s2, mlp_feat_out)
    return p


# ----------------------------------------------------------------------------
# Forward pass (CodeSimContrastiveCLS.forward, eval mode)
# ----------------------------------------------------------------------------
def code_sim_contrastive_cls_forward(params, cfg, input_ids, token_type_ids,
                                     attention_mask, use_proj=True):
    B, S = input_ids.shape
    H = cfg["hidden"]
    nH = cfg["heads"]
    dH = H // nH

    # --- BERT embeddings (gathers = glue); bf16 into the LN kernel, f32 stats ---
    emb = (params["word_emb"][input_ids]
           + params["pos_emb"][jnp.arange(S)][None, :, :]
           + params["type_emb"][token_type_ids])
    h = layernorm(emb.reshape(B * S, H).astype(BF16),
                  params["emb_ln_g"], params["emb_ln_b"])

    # additive attention-mask bias per batch row (broadcast over heads in-kernel)
    mask_bias = ((1.0 - attention_mask.astype(F32)) * (-1e9)).reshape(B, 1, S)

    # --- BERT encoder layers ---
    for lyr in params["layers"]:
        x_res = h                                            # (B*S, H) bf16
        # fused QKV projection, written as (3, B*S, H) — no reshape/transpose glue
        qkv3 = linear(h, lyr["qkv_w"], lyr["qkv_b"], split3=True)
        ctx = flash_attention(qkv3, mask_bias, nH=nH, dH=dH, S=S)   # (B*S, H)
        # attention output projection + residual + LayerNorm (fused epilogue)
        h = linear(ctx, lyr["o_w"], lyr["o_b"],
                   residual=x_res, ln_gamma=lyr["attn_ln_g"], ln_beta=lyr["attn_ln_b"])
        h_mid = h
        inter = linear(h, lyr["i_w"], lyr["i_b"], act="gelu")        # (B*S, I)
        # FFN down-projection + residual + LayerNorm (fused epilogue)
        h = linear(inter, lyr["f_w"], lyr["f_b"],
                   residual=h_mid, ln_gamma=lyr["ffn_ln_g"], ln_beta=lyr["ffn_ln_b"])

    # --- CLS gather + pooler (+ projection MLP) ---
    cls = h.reshape(B, S, H)[:, 0, :]
    if not use_proj:
        return linear(cls, params["pooler_w"], params["pooler_b"],
                      act="tanh", out_dtype=F32)
    return pooler_proj_head(cls, params)


# ----------------------------------------------------------------------------
if __name__ == "__main__":
    # Small config: hidden/intermediate kept at 128/256 so every column block
    # is either a multiple of 128 lanes or the full dim (TPU (8,128) tiling).
    cfg = dict(vocab=64, hidden=128, heads=4, intermediate=256,
               layers=2, max_pos=32, type_vocab=2)
    mlp_sizes = (64, 48, 32)   # small analogue of the default (768, 512, 256)
    mlp_feat_out = 32

    key = jax.random.PRNGKey(0)
    k_params, k_ids = jax.random.split(key)
    params = init_params(k_params, cfg, mlp_sizes, mlp_feat_out)

    B, S = 2, 16
    input_ids = jax.random.randint(k_ids, (B, S), 0, cfg["vocab"], dtype=jnp.int32)
    token_type_ids = jnp.zeros((B, S), dtype=jnp.int32)
    attention_mask = jnp.ones((B, S), dtype=jnp.int32).at[1, -4:].set(0)  # pad tail of row 1

    out = code_sim_contrastive_cls_forward(params, cfg, input_ids,
                                           token_type_ids, attention_mask,
                                           use_proj=True)
    out = jax.block_until_ready(out)
    assert out.shape == (B, mlp_feat_out) and bool(jnp.all(jnp.isfinite(out)))
    print("KERNEL_OK")
</pallas_src>

<mosaic_0001>
module attributes {stable_mosaic.version = 11 : i64} {
  func.func @_layernorm_kernel(%arg0: i32, %arg1: memref<32x128xbf16, #tpu.memory_space<vmem>>, %arg2: memref<1x128xf32, #tpu.memory_space<vmem>>, %arg3: memref<1x128xf32, #tpu.memory_space<vmem>>, %arg4: memref<32x128xbf16, #tpu.memory_space<vmem>>) attributes {dimension_semantics = [#tpu.dimension_semantics<parallel>], iteration_bounds = array<i64: 1>, scalar_prefetch = 0 : i64, scratch_operands = 0 : i64, tpu.core_type = #tpu.core_type<tc>, window_params = [{transform_indices = @transform_0, window_bounds = array<i64: 32, 128>}, {pipeline_mode = #tpu.pipeline_mode<synchronous>, transform_indices = @transform_1, window_bounds = array<i64: 1, 128>}, {pipeline_mode = #tpu.pipeline_mode<synchronous>, transform_indices = @transform_2, window_bounds = array<i64: 1, 128>}, {transform_indices = @transform_3, window_bounds = array<i64: 32, 128>}]} {
    %c0 = arith.constant 0 : index
    %c0_0 = arith.constant 0 : index
    %0 = vector.load %arg1[%c0, %c0_0] : memref<32x128xbf16, #tpu.memory_space<vmem>>, vector<32x128xbf16>
    %1 = arith.extf %0 : vector<32x128xbf16> to vector<32x128xf32>
    %cst = arith.constant dense<0.000000e+00> : vector<32xf32>
    %2 = vector.multi_reduction <add>, %1, %cst [1] : vector<32x128xf32> to vector<32xf32>
    %3 = vector.shape_cast %2 : vector<32xf32> to vector<32x1xf32>
    %cst_1 = arith.constant 1.280000e+02 : f32
    %4 = vector.broadcast %cst_1 : f32 to vector<32x1xf32>
    %5 = arith.divf %3, %4 : vector<32x1xf32>
    %6 = vector.broadcast %5 : vector<32x1xf32> to vector<32x128xf32>
    %7 = arith.subf %1, %6 : vector<32x128xf32>
    %8 = arith.mulf %7, %7 : vector<32x128xf32>
    %cst_2 = arith.constant dense<0.000000e+00> : vector<32xf32>
    %9 = vector.multi_reduction <add>, %8, %cst_2 [1] : vector<32x128xf32> to vector<32xf32>
    %10 = vector.shape_cast %9 : vector<32xf32> to vector<32x1xf32>
    %cst_3 = arith.constant 1.280000e+02 : f32
    %11 = vector.broadcast %cst_3 : f32 to vector<32x1xf32>
    %12 = arith.divf %10, %11 : vector<32x1xf32>
    %cst_4 = arith.constant 9.99999996E-13 : f32
    %13 = vector.broadcast %cst_4 : f32 to vector<32x1xf32>
    %14 = arith.addf %12, %13 : vector<32x1xf32>
    %15 = math.rsqrt %14 : vector<32x1xf32>
    %16 = vector.broadcast %15 : vector<32x1xf32> to vector<32x128xf32>
    %17 = arith.mulf %7, %16 : vector<32x128xf32>
    %c0_5 = arith.constant 0 : index
    %c0_6 = arith.constant 0 : index
    %18 = vector.load %arg2[%c0_5, %c0_6] : memref<1x128xf32, #tpu.memory_space<vmem>>, vector<1x128xf32>
    %19 = vector.broadcast %18 : vector<1x128xf32> to vector<32x128xf32>
    %20 = arith.mulf %17, %19 : vector<32x128xf32>
    %c0_7 = arith.constant 0 : index
    %c0_8 = arith.constant 0 : index
    %21 = vector.load %arg3[%c0_7, %c0_8] : memref<1x128xf32, #tpu.memory_space<vmem>>, vector<1x128xf32>
    %22 = vector.broadcast %21 : vector<1x128xf32> to vector<32x128xf32>
    %23 = arith.addf %20, %22 : vector<32x128xf32>
    %24 = arith.truncf %23 : vector<32x128xf32> to vector<32x128xbf16>
    %c0_9 = arith.constant 0 : index
    %c0_10 = arith.constant 0 : index
    %25 = vector.load %arg4[%c0_9, %c0_10] : memref<32x128xbf16, #tpu.memory_space<vmem>>, vector<32x128xbf16>
    tpu.vector_store %arg4[%c0_9, %c0_10], %24 {strides = array<i32>} : memref<32x128xbf16, #tpu.memory_space<vmem>>, vector<32x128xbf16>,
    return
  }
  func.func @transform_0(%arg0: i32) -> (i32, i32) {
    %c0_i32 = arith.constant 0 : i32
    %c0_i32_0 = arith.constant 0 : i32
    return %arg0, %c0_i32 : i32, i32
  }
  func.func @transform_1(%arg0: i32) -> (i32, i32) {
    %c0_i32 = arith.constant 0 : i32
    %c0_i32_0 = arith.constant 0 : i32
    %c0_i32_1 = arith.constant 0 : i32
    return %c0_i32, %c0_i32_0 : i32, i32
  }
  func.func @transform_2(%arg0: i32) -> (i32, i32) {
    %c0_i32 = arith.constant 0 : i32
    %c0_i32_0 = arith.constant 0 : i32
    %c0_i32_1 = arith.constant 0 : i32
    return %c0_i32, %c0_i32_0 : i32, i32
  }
  func.func @transform_3(%arg0: i32) -> (i32, i32) {
    %c0_i32 = arith.constant 0 : i32
    %c0_i32_0 = arith.constant 0 : i32
    return %arg0, %c0_i32 : i32, i32
  }
}

</mosaic_0001>

<llo_original>
// kernel: tpu_custom_call.1
$region0: #{tpu_custom_call.1}
  #allocation0 [shape = 'u32[]', space=smem, size = 0x4, offset = 0x4, fixed_abs, tag = 'smem constant byte address 0x4 - core index']
  #allocation1 [shape = 'u32[144,128]{1,0:T(1,128)}', space=vmem, size = 0x12000, scoped, tag = 'internal scratch']
  %s0 = inlined_call_operand.hbm [shape: bf16[32,128], index: 0, kind: input, shape index: {}]
  %s1 = inlined_call_operand.vmem [shape: f32[1,128], index: 1, kind: input, shape index: {}]
  %s2 = inlined_call_operand.vmem [shape: f32[1,128], index: 2, kind: input, shape index: {}]
  %s3 = inlined_call_operand.hbm [shape: bf16[32,128], index: 3, kind: output, shape index: {}]
  %s4 = sld [smem:[#allocation0]]
  $region26: #{tpu_custom_call.1} parent=0
    _
  %s6 = ssub.s32 1, %s4
  %s7 = scalar_select 0, %s6, %s4
  $region1: #{tpu_custom_call.1} parent=0
    #allocation2 [shape = 'u8[8192]{0}', space=vmem, size = 0x2000, scoped, tag = 'input window, operand 0, single buffered']
    #allocation3 [shape = 's32[1]{0}', space=sflag, size = 0x4, scoped, tag = 'scoped memory for tpu_custom_call.1']
    #allocation4 [shape = 's32[1]{0}', space=sflag, size = 0x4, scoped, tag = 'scoped memory for tpu_custom_call.1']
    #allocation5 [shape = 'u8[8192]{0}', space=vmem, size = 0x2000, scoped, tag = 'output window, operand 0, single buffered']
    %8 = vsyncpa [#allocation3], 0
    %9 = vsyncpa [#allocation4], 0
    // Predicated region
    $region2: #{tpu_custom_call.1} parent=1 // pred_check
      _
    $region3: #{tpu_custom_call.1} parent=1 // pred_check_branch
      %11 = sbr.rel (0) target = $region5
    $region4: #{tpu_custom_call.1} parent=1 // pred_region
      %s13 = ssub.s32 256, 256
      %14 = vsyncadd [#allocation3], %s13
      %s15 = sshll.u32 [#allocation2], 4
      %s16 = int_to_ptr.vmem [resolvable:$true] %s15
      %21 = dma.hbm_to_vmem [thread:$0]  %s0, 256, %s16, [#allocation3], 64, 64, 4
    $region5: #{tpu_custom_call.1} parent=1 // pred_fallthru
      _
    // Predicated region
    $region6: #{tpu_custom_call.1} parent=1 // pred_check
      _
    $region7: #{tpu_custom_call.1} parent=1 // pred_check_branch
      %23 = sbr.rel (0) target = $region9
    $region8: #{tpu_custom_call.1} parent=1 // pred_region
      _
    $region9: #{tpu_custom_call.1} parent=1 // pred_fallthru
      _
    // Predicated region
    $region10: #{tpu_custom_call.1} parent=1 // pred_check
      _
    $region11: #{tpu_custom_call.1} parent=1 // pred_check_branch
      %25 = sbr.rel (0) target = $region13
    $region12: #{tpu_custom_call.1} parent=1 // pred_region
      _
    $region13: #{tpu_custom_call.1} parent=1 // pred_fallthru
      _
    // Predicated region
    $region14: #{tpu_custom_call.1} parent=1 // pred_check
      _
    $region15: #{tpu_custom_call.1} parent=1 // pred_check_branch
      %27 = sbr.rel (0) target = $region17
    $region16: #{tpu_custom_call.1} parent=1 // pred_region
      %28 = dma.done [#allocation3], 256
    $region17: #{tpu_custom_call.1} parent=1 // pred_fallthru
      _
    %v29 = vld [vmem:[#allocation2] sm:$0xf]
    %v30 = vld [vmem:[#allocation2 + $0x4] sm:$0xf]
    %v31 = vld [vmem:[#allocation2 + $0x8] sm:$0xf]
    %v32 = vld [vmem:[#allocation2 + $0xc] sm:$0xf]
    %v33 = vunpack.c.l.bf16 %v29
    %v34 = vunpack.c.l.bf16 %v30
    %v35 = vunpack.c.l.bf16 %v31
    %v36 = vunpack.c.l.bf16 %v32
    %37 = vadd.xlane.f32.xlu0 %v33
    %v38 = vpop.xlane.xlu0 %37
    %39 = vadd.xlane.f32.xlu0 %v34
    %v40 = vpop.xlane.xlu0 %39
    %41 = vadd.xlane.f32.xlu0 %v35
    %v42 = vpop.xlane.xlu0 %41
    %43 = vadd.xlane.f32.xlu0 %v36
    %v44 = vpop.xlane.xlu0 %43
    %v45 = vrcp.pop 128.0
    %v46 = vmul.f32 %v38, %v45
    %v47 = vmul.f32 %v40, %v45
    %v48 = vmul.f32 %v42, %v45
    %v49 = vmul.f32 %v44, %v45
    %v50 = vsub.f32 %v33, %v46
    %v51 = vsub.f32 %v34, %v47
    %v52 = vsub.f32 %v35, %v48
    %v53 = vsub.f32 %v36, %v49
    %v54 = vmul.f32 %v50, %v50
    %v55 = vmul.f32 %v51, %v51
    %v56 = vmul.f32 %v52, %v52
    %v57 = vmul.f32 %v53, %v53
    %58 = vadd.xlane.f32.xlu0 %v54
    %v59 = vpop.xlane.xlu0 %58
    %60 = vadd.xlane.f32.xlu0 %v55
    %v61 = vpop.xlane.xlu0 %60
    %62 = vadd.xlane.f32.xlu0 %v56
    %v63 = vpop.xlane.xlu0 %62
    %64 = vadd.xlane.f32.xlu0 %v57
    %v65 = vpop.xlane.xlu0 %64
    %v66 = vmul.f32 %v59, %v45
    %v67 = vmul.f32 %v61, %v45
    %v68 = vmul.f32 %v63, %v45
    %v69 = vmul.f32 %v65, %v45
    %v70 = vadd.f32 %v66, 1e-12
    %v71 = vadd.f32 %v67, 1e-12
    %v72 = vadd.f32 %v68, 1e-12
    %v73 = vadd.f32 %v69, 1e-12
    %v74 = vrsqrt.pop %v70
    %v75 = vrsqrt.pop %v71
    %v76 = vrsqrt.pop %v72
    %v77 = vrsqrt.pop %v73
    %v78 = vmul.f32 %v50, %v74
    %v79 = vmul.f32 %v51, %v75
    %v80 = vmul.f32 %v52, %v76
    %v81 = vmul.f32 %v53, %v77
    %v82 = vld [vmem:[%s1] sm:$0x1]
    %v84 = vlaneseq
    %v85 = vshrl.u32 %v84, 7
    %v86 = vsub.s32 0, %v85
    %v87 = vrot.slane %v82, %v86
    %v89 = vmul.f32 %v78, %v87
    %v90 = vmul.f32 %v79, %v87
    %v91 = vmul.f32 %v80, %v87
    %v92 = vmul.f32 %v81, %v87
    %v93 = vld [vmem:[%s2] sm:$0x1]
    %v95 = vlaneseq
    %v96 = vshrl.u32 %v95, 7
    %v97 = vsub.s32 0, %v96
    %v98 = vrot.slane %v93, %v97
    %v100 = vadd.f32 %v89, %v98
    %v101 = vadd.f32 %v90, %v98
    %v102 = vadd.f32 %v91, %v98
    %v103 = vadd.f32 %v92, %v98
    %v104 = vpack.c.bf16 %v101, %v100
    %v105 = vpack.c.bf16 %v103, %v102
    %v108 = vunpack.c.l.b16 %v104
    %v109 = vunpack.c.h.b16 %v104
    %v110 = vunpack.c.l.b16 %v105
    %v111 = vunpack.c.h.b16 %v105
    %v112 = vpack.c.b16 %v108, %v108
    %v113 = vpack.c.b16 %v109, %v109
    %v114 = vpack.c.b16 %v110, %v110
    %v115 = vpack.c.b16 %v111, %v111
    %120 = vst [vmem:[#allocation5] sm:$0xf] %v112
    %121 = vst [vmem:[#allocation5 + $0x4] sm:$0xf] %v113
    %122 = vst [vmem:[#allocation5 + $0x8] sm:$0xf] %v114
    %123 = vst [vmem:[#allocation5 + $0xc] sm:$0xf] %v115
    // Predicated region
    $region18: #{tpu_custom_call.1} parent=1 // pred_check
      _
    $region19: #{tpu_custom_call.1} parent=1 // pred_check_branch
      %125 = sbr.rel (0) target = $region21
    $region20: #{tpu_custom_call.1} parent=1 // pred_region
      %s127 = ssub.s32 256, 256
      %128 = vsyncadd [#allocation4], %s127
      %s129 = sshll.u32 [#allocation5], 4
      %s130 = int_to_ptr.vmem [resolvable:$true] %s129
      %135 = dma.vmem_to_hbm [thread:$0]  %s130, 256, %s3, [#allocation4], 64, 64, 4
    $region21: #{tpu_custom_call.1} parent=1 // pred_fallthru
      _
    // Predicated region
    $region22: #{tpu_custom_call.1} parent=1 // pred_check
      _
    $region23: #{tpu_custom_call.1} parent=1 // pred_check_branch
      %137 = sbr.rel (0) target = $region25
    $region24: #{tpu_custom_call.1} parent=1 // pred_region
      %138 = dma.done [#allocation4], 256
    $region25: #{tpu_custom_call.1} parent=1 // pred_fallthru
      _
    %139 = vsyncpa [#allocation3], 1
    %140 = vsyncpa [#allocation4], 1

</llo_original>
